<compile_context>
chip_gen: v7x
topology: tpu7x:2x2x1
jax: 0.10.0
libtpu: 0.0.40
codegen_flags: <defaults>
</compile_context>

<pallas_src>
import numpy as np
import jax
import jax.numpy as jnp
from jax.experimental import pallas as pl
from jax.experimental.pallas import tpu as pltpu

H, W = 6, 7            # board spatial size implied by input_tensor()
BN_EPS = 1e-5          # torch BatchNorm2d default
OUT_LANES = 128        # lane-dense output width (logits live in [:, :7])


def _round_up(x, m):
    return ((x + m - 1) // m) * m


# ----------------------------------------------------------------------------
# Pallas kernel: whole forward pass, fully batched, 4 matmuls + 3 relus.
# ----------------------------------------------------------------------------
def policy_kernel(x_ref, m1_ref, c1_ref, m2_ref, c2_ref, m3_ref, c3_ref,
                  wl_ref, bl_ref, out_ref):
    """
    x_ref : (bb, 42)      raw boards, flattened (h, w)             f32
    m1_ref: (84, 588)     unrolled conv1 (+bn1)                    bf16
    c1_ref: (1, 588)      folded bias 1                            f32
    m2_ref: (588, 196)    unrolled conv2 (+bn2)                    bf16
    c2_ref: (1, 196)      folded bias 2                            f32
    m3_ref: (196, 49)     unrolled conv3 (+bn3)                    bf16
    c3_ref: (1, 49)       folded bias 3                            f32
    wl_ref: (49, 128)     linear1 weight^T, zero-padded lanes      bf16
    bl_ref: (1, 128)      linear1 bias, zero-padded lanes          f32
    out_ref: (bb, 128)    logits in [:, :7]                        f32
    """
    x = x_ref[...]                                           # (bb, 42) f32
    # input_tensor(): channel 0 = my = x, channel 1 = his = relu(-x),
    # channel-major layout (ci*42 + h*7 + w) -> (bb, 84).
    z0 = jnp.concatenate([x, jnp.maximum(-x, 0.0)], axis=-1).astype(jnp.bfloat16)
    # cnn1 + batchnorm1 + relu   (all 12 output positions in one matmul)
    z1 = jnp.maximum(
        jnp.dot(z0, m1_ref[...], preferred_element_type=jnp.float32)
        + c1_ref[...], 0.0)
    # cnn2 + batchnorm2 + relu2
    z2 = jnp.maximum(
        jnp.dot(z1.astype(jnp.bfloat16), m2_ref[...],
                preferred_element_type=jnp.float32) + c2_ref[...], 0.0)
    # cnn3 + batchnorm3 ; flatten + view(-1, 49) is the identity ; relu3
    z3 = jnp.maximum(
        jnp.dot(z2.astype(jnp.bfloat16), m3_ref[...],
                preferred_element_type=jnp.float32) + c3_ref[...], 0.0)
    # linear1 -> (bb, 128) lane-dense store; real logits are lanes [0, 7).
    out_ref[...] = (
        jnp.dot(z3.astype(jnp.bfloat16), wl_ref[...],
                preferred_element_type=jnp.float32) + bl_ref[...])


# ----------------------------------------------------------------------------
# Host-side, data-independent parameter preparation (done once).
# ----------------------------------------------------------------------------
def fold_bn(w, b, gamma, beta, mean, var):
    """Fold eval-mode BatchNorm2d into the preceding conv's weight/bias."""
    scale = gamma / jnp.sqrt(var + BN_EPS)
    w_f = w * scale[:, None, None, None]
    b_f = (b - mean) * scale + beta
    return w_f, b_f


def conv_as_matrix(w, in_hw, stride):
    """Unroll a VALID conv (OIHW weight) into a dense matrix.

    Input vector layout : index = ci*Hi*Wi + h*Wi + w      (channel-major)
    Output vector layout: index = co*Ho*Wo + oh*Wo + ow    (channel-major)
    Channel-major on both sides means layer L's output vector is exactly the
    input layout layer L+1 expects (and layer 3's 1x1 output matches torch's
    flatten order for the linear head).
    """
    co_n, ci_n, kh_n, kw_n = w.shape
    hi, wi = in_hw
    sh, sw = stride
    ho = (hi - kh_n) // sh + 1
    wo = (wi - kw_n) // sw + 1
    grids = np.meshgrid(np.arange(co_n), np.arange(ci_n), np.arange(kh_n),
                        np.arange(kw_n), np.arange(ho), np.arange(wo),
                        indexing="ij")
    co_i, ci_i, kh_i, kw_i, oh_i, ow_i = [g.ravel() for g in grids]
    rows = (ci_i * hi + (oh_i * sh + kh_i)) * wi + (ow_i * sw + kw_i)
    cols = co_i * (ho * wo) + oh_i * wo + ow_i
    vals = w[co_i, ci_i, kh_i, kw_i]
    m = jnp.zeros((ci_n * hi * wi, ho * wo * co_n), w.dtype)
    m = m.at[rows, cols].set(vals)
    return m, (ho, wo)


def prepare_params(p):
    """Fold BN + unroll convs.  Call once; reuse the result for every forward."""
    w1, b1 = fold_bn(p["cnn1_w"], p["cnn1_b"], p["bn1_g"], p["bn1_b"], p["bn1_m"], p["bn1_v"])
    w2, b2 = fold_bn(p["cnn2_w"], p["cnn2_b"], p["bn2_g"], p["bn2_b"], p["bn2_m"], p["bn2_v"])
    w3, b3 = fold_bn(p["cnn3_w"], p["cnn3_b"], p["bn3_g"], p["bn3_b"], p["bn3_m"], p["bn3_v"])

    m1, hw1 = conv_as_matrix(w1, (H, W), (1, 1))   # (84, 588),  hw1 = (3, 4)
    m2, hw2 = conv_as_matrix(w2, hw1, (1, 2))      # (588, 196), hw2 = (2, 2)
    m3, hw3 = conv_as_matrix(w3, hw2, (1, 1))      # (196, 49),  hw3 = (1, 1)
    assert hw3 == (1, 1), hw3

    # Channel-major biases: each output channel's bias repeated over positions.
    c1 = jnp.repeat(b1, hw1[0] * hw1[1]).reshape(1, -1).astype(jnp.float32)  # (1, 588)
    c2 = jnp.repeat(b2, hw2[0] * hw2[1]).reshape(1, -1).astype(jnp.float32)  # (1, 196)
    c3 = b3.reshape(1, -1).astype(jnp.float32)                               # (1, 49)

    # Lane-dense linear head: zero-pad to 128 output lanes.
    wl = jnp.zeros((49, OUT_LANES), jnp.float32).at[:, :7].set(p["lin_w"].T)
    bl = jnp.zeros((1, OUT_LANES), jnp.float32).at[:, :7].set(p["lin_b"])

    # bf16 weights for the MXU (biases stay f32 for the VPU epilogue).
    m1 = m1.astype(jnp.bfloat16)
    m2 = m2.astype(jnp.bfloat16)
    m3 = m3.astype(jnp.bfloat16)
    wl = wl.astype(jnp.bfloat16)
    return (m1, c1, m2, c2, m3, c3, wl, bl)


# ----------------------------------------------------------------------------
# Forward wrapper.
# ----------------------------------------------------------------------------
def policy_forward(x, params, *, batch_block=None):
    """x: (N, 6, 7) or (N, 42) float board; params: output of prepare_params."""
    n = x.shape[0]
    assert int(np.prod(x.shape[1:])) == H * W, x.shape
    x2 = x.reshape(n, H * W).astype(jnp.float32)

    m1, c1, m2, c2, m3, c3, wl, bl = params

    # Batch tile: multiple of 8 (sublane constraint), default 512 so the grid
    # pipelines DMA with compute and shards across TensorCores at real batch
    # sizes, clamped down for tiny batches so toy calls stay cheap.
    if batch_block is None:
        bb = min(512, _round_up(n, 8))
    else:
        bb = _round_up(int(batch_block), 8)
    n_pad = _round_up(n, bb)
    if n_pad != n:
        x2 = jnp.pad(x2, ((0, n_pad - n), (0, 0)))
    grid = (n_pad // bb,)

    def full_spec(arr):
        return pl.BlockSpec(arr.shape, lambda i: (0, 0))

    # Advisory cost hint for XLA scheduling around the custom call.
    mm_macs = 84 * 588 + 588 * 196 + 196 * 49 + 49 * OUT_LANES
    weight_bytes = 2 * mm_macs + 4 * (588 + 196 + 49 + OUT_LANES)
    cost = pl.CostEstimate(
        flops=2 * n_pad * mm_macs,
        transcendentals=0,
        bytes_accessed=n_pad * 4 * (H * W + OUT_LANES) + weight_bytes,
    )

    out = pl.pallas_call(
        policy_kernel,
        out_shape=jax.ShapeDtypeStruct((n_pad, OUT_LANES), jnp.float32),
        grid=grid,
        in_specs=[pl.BlockSpec((bb, H * W), lambda i: (i, 0))] +
                 [full_spec(a) for a in (m1, c1, m2, c2, m3, c3, wl, bl)],
        out_specs=pl.BlockSpec((bb, OUT_LANES), lambda i: (i, 0)),
        compiler_params=pltpu.CompilerParams(dimension_semantics=("parallel",)),
        cost_estimate=cost,
    )(x2, m1, c1, m2, c2, m3, c3, wl, bl)

    return out[:n, :7]


# ----------------------------------------------------------------------------
# Pure-JAX reference mirroring the PyTorch forward (eval mode), all f32.
# ----------------------------------------------------------------------------
def reference_forward(x, p):
    n = x.shape[0]
    xf = x.reshape(n, 1, H, W).astype(jnp.float32)
    inp = jnp.concatenate([xf, jnp.maximum(-xf, 0.0)], axis=1)     # (N, 2, 6, 7)

    def conv_bn(h, w, b, g, bt, m, v, strides):
        c = jax.lax.conv_general_dilated(
            h, w, window_strides=strides, padding="VALID",
            dimension_numbers=("NCHW", "OIHW", "NCHW"))
        c = c + b[None, :, None, None]
        s = g / jnp.sqrt(v + BN_EPS)
        return (c - m[None, :, None, None]) * s[None, :, None, None] + bt[None, :, None, None]

    h = jnp.maximum(conv_bn(inp, p["cnn1_w"], p["cnn1_b"], p["bn1_g"], p["bn1_b"],
                            p["bn1_m"], p["bn1_v"], (1, 1)), 0.0)
    h = jnp.maximum(conv_bn(h, p["cnn2_w"], p["cnn2_b"], p["bn2_g"], p["bn2_b"],
                            p["bn2_m"], p["bn2_v"], (1, 2)), 0.0)
    h = conv_bn(h, p["cnn3_w"], p["cnn3_b"], p["bn3_g"], p["bn3_b"],
                p["bn3_m"], p["bn3_v"], (1, 1))
    h = jnp.maximum(h.reshape(n, 49), 0.0)
    return h @ p["lin_w"].T + p["lin_b"]


if __name__ == "__main__":
    key = jax.random.PRNGKey(0)
    ks = jax.random.split(key, 22)

    p = {
        "cnn1_w": 0.1 * jax.random.normal(ks[1], (49, 2, 4, 4), jnp.float32),
        "cnn1_b": 0.1 * jax.random.normal(ks[2], (49,), jnp.float32),
        "bn1_g": 1.0 + 0.1 * jax.random.normal(ks[3], (49,), jnp.float32),
        "bn1_b": 0.1 * jax.random.normal(ks[4], (49,), jnp.float32),
        "bn1_m": 0.1 * jax.random.normal(ks[5], (49,), jnp.float32),
        "bn1_v": jax.random.uniform(ks[6], (49,), jnp.float32, 0.5, 1.5),
        "cnn2_w": 0.1 * jax.random.normal(ks[7], (49, 49, 2, 2), jnp.float32),
        "cnn2_b": 0.1 * jax.random.normal(ks[8], (49,), jnp.float32),
        "bn2_g": 1.0 + 0.1 * jax.random.normal(ks[9], (49,), jnp.float32),
        "bn2_b": 0.1 * jax.random.normal(ks[10], (49,), jnp.float32),
        "bn2_m": 0.1 * jax.random.normal(ks[11], (49,), jnp.float32),
        "bn2_v": jax.random.uniform(ks[12], (49,), jnp.float32, 0.5, 1.5),
        "cnn3_w": 0.1 * jax.random.normal(ks[13], (49, 49, 2, 2), jnp.float32),
        "cnn3_b": 0.1 * jax.random.normal(ks[14], (49,), jnp.float32),
        "bn3_g": 1.0 + 0.1 * jax.random.normal(ks[15], (49,), jnp.float32),
        "bn3_b": 0.1 * jax.random.normal(ks[16], (49,), jnp.float32),
        "bn3_m": 0.1 * jax.random.normal(ks[17], (49,), jnp.float32),
        "bn3_v": jax.random.uniform(ks[18], (49,), jnp.float32, 0.5, 1.5),
        "lin_w": 0.1 * jax.random.normal(ks[19], (7, 49), jnp.float32),
        "lin_b": 0.1 * jax.random.normal(ks[20], (7,), jnp.float32),
    }
    params = prepare_params(p)              # one-time, data-independent prep

    # bf16 matmuls vs f32 reference -> relaxed tolerance.
    RTOL, ATOL = 5e-2, 2e-2

    # Case 1: tiny batch (N=2), single grid step after rounding bb to 8.
    N = 2
    x = jax.random.randint(ks[0], (N, H, W), -1, 2).astype(jnp.float32)
    out = jax.block_until_ready(policy_forward(x, params))
    ref = jax.block_until_ready(reference_forward(x, p))
    assert out.shape == (N, 7), out.shape
    np.testing.assert_allclose(np.asarray(out), np.asarray(ref), rtol=RTOL, atol=ATOL)

    # Case 2: batch not a multiple of the tile (exercises padding + grid > 1).
    N2 = 20
    x2 = jax.random.randint(ks[21], (N2, H, W), -1, 2).astype(jnp.float32)
    out2 = jax.block_until_ready(policy_forward(x2, params, batch_block=8))
    ref2 = jax.block_until_ready(reference_forward(x2, p))
    assert out2.shape == (N2, 7), out2.shape
    np.testing.assert_allclose(np.asarray(out2), np.asarray(ref2), rtol=RTOL, atol=ATOL)

    print("KERNEL_OK")
</pallas_src>

<mosaic_0001>
module attributes {stable_mosaic.version = 11 : i64} {
  func.func @policy_kernel(%arg0: i32, %arg1: memref<8x42xf32, #tpu.memory_space<vmem>>, %arg2: memref<84x588xbf16, #tpu.memory_space<vmem>>, %arg3: memref<1x588xf32, #tpu.memory_space<vmem>>, %arg4: memref<588x196xbf16, #tpu.memory_space<vmem>>, %arg5: memref<1x196xf32, #tpu.memory_space<vmem>>, %arg6: memref<196x49xbf16, #tpu.memory_space<vmem>>, %arg7: memref<1x49xf32, #tpu.memory_space<vmem>>, %arg8: memref<49x128xbf16, #tpu.memory_space<vmem>>, %arg9: memref<1x128xf32, #tpu.memory_space<vmem>>, %arg10: memref<8x128xf32, #tpu.memory_space<vmem>>) attributes {dimension_semantics = [#tpu.dimension_semantics<parallel>], iteration_bounds = array<i64: 1>, scalar_prefetch = 0 : i64, scratch_operands = 0 : i64, tpu.core_type = #tpu.core_type<tc>, window_params = [{transform_indices = @transform_0, window_bounds = array<i64: 8, 42>}, {pipeline_mode = #tpu.pipeline_mode<synchronous>, transform_indices = @transform_1, window_bounds = array<i64: 84, 588>}, {pipeline_mode = #tpu.pipeline_mode<synchronous>, transform_indices = @transform_2, window_bounds = array<i64: 1, 588>}, {pipeline_mode = #tpu.pipeline_mode<synchronous>, transform_indices = @transform_3, window_bounds = array<i64: 588, 196>}, {pipeline_mode = #tpu.pipeline_mode<synchronous>, transform_indices = @transform_4, window_bounds = array<i64: 1, 196>}, {pipeline_mode = #tpu.pipeline_mode<synchronous>, transform_indices = @transform_5, window_bounds = array<i64: 196, 49>}, {pipeline_mode = #tpu.pipeline_mode<synchronous>, transform_indices = @transform_6, window_bounds = array<i64: 1, 49>}, {pipeline_mode = #tpu.pipeline_mode<synchronous>, transform_indices = @transform_7, window_bounds = array<i64: 49, 128>}, {pipeline_mode = #tpu.pipeline_mode<synchronous>, transform_indices = @transform_8, window_bounds = array<i64: 1, 128>}, {transform_indices = @transform_9, window_bounds = array<i64: 8, 128>}]} {
    %c0 = arith.constant 0 : index
    %c0_0 = arith.constant 0 : index
    %0 = vector.load %arg1[%c0, %c0_0] : memref<8x42xf32, #tpu.memory_space<vmem>>, vector<8x42xf32>
    %cst = arith.constant 0.000000e+00 : f32
    %1 = vector.broadcast %cst : f32 to vector<8x42xf32>
    %2 = arith.subf %1, %0 : vector<8x42xf32>
    %cst_1 = arith.constant 0.000000e+00 : f32
    %3 = vector.broadcast %cst_1 : f32 to vector<8x42xf32>
    %4 = arith.maximumf %2, %3 : vector<8x42xf32>
    %5 = tpu.concatenate %0, %4 in 1 : vector<8x42xf32>, vector<8x42xf32> -> vector<8x84xf32>
    %6 = arith.truncf %5 : vector<8x84xf32> to vector<8x84xbf16>
    %c0_2 = arith.constant 0 : index
    %c0_3 = arith.constant 0 : index
    %7 = vector.load %arg2[%c0_2, %c0_3] : memref<84x588xbf16, #tpu.memory_space<vmem>>, vector<84x588xbf16>
    %cst_4 = arith.constant dense<0.000000e+00> : vector<8x588xf32>
    %8 = tpu.matmul %6, %7, %cst_4 {dimension_numbers = #tpu.dot_dimension_numbers<[1], [0], [0], [1], [0, 0, 1, 1], [], []>} : vector<8x84xbf16>, vector<84x588xbf16>, vector<8x588xf32> -> vector<8x588xf32>
    %c0_5 = arith.constant 0 : index
    %c0_6 = arith.constant 0 : index
    %9 = vector.load %arg3[%c0_5, %c0_6] : memref<1x588xf32, #tpu.memory_space<vmem>>, vector<1x588xf32>
    %10 = vector.broadcast %9 : vector<1x588xf32> to vector<8x588xf32>
    %11 = arith.addf %8, %10 : vector<8x588xf32>
    %cst_7 = arith.constant 0.000000e+00 : f32
    %12 = vector.broadcast %cst_7 : f32 to vector<8x588xf32>
    %13 = arith.maximumf %11, %12 : vector<8x588xf32>
    %14 = arith.truncf %13 : vector<8x588xf32> to vector<8x588xbf16>
    %c0_8 = arith.constant 0 : index
    %c0_9 = arith.constant 0 : index
    %15 = vector.load %arg4[%c0_8, %c0_9] : memref<588x196xbf16, #tpu.memory_space<vmem>>, vector<588x196xbf16>
    %cst_10 = arith.constant dense<0.000000e+00> : vector<8x196xf32>
    %16 = tpu.matmul %14, %15, %cst_10 {dimension_numbers = #tpu.dot_dimension_numbers<[1], [0], [0], [1], [0, 0, 1, 1], [], []>} : vector<8x588xbf16>, vector<588x196xbf16>, vector<8x196xf32> -> vector<8x196xf32>
    %c0_11 = arith.constant 0 : index
    %c0_12 = arith.constant 0 : index
    %17 = vector.load %arg5[%c0_11, %c0_12] : memref<1x196xf32, #tpu.memory_space<vmem>>, vector<1x196xf32>
    %18 = vector.broadcast %17 : vector<1x196xf32> to vector<8x196xf32>
    %19 = arith.addf %16, %18 : vector<8x196xf32>
    %cst_13 = arith.constant 0.000000e+00 : f32
    %20 = vector.broadcast %cst_13 : f32 to vector<8x196xf32>
    %21 = arith.maximumf %19, %20 : vector<8x196xf32>
    %22 = arith.truncf %21 : vector<8x196xf32> to vector<8x196xbf16>
    %c0_14 = arith.constant 0 : index
    %c0_15 = arith.constant 0 : index
    %23 = vector.load %arg6[%c0_14, %c0_15] : memref<196x49xbf16, #tpu.memory_space<vmem>>, vector<196x49xbf16>
    %cst_16 = arith.constant dense<0.000000e+00> : vector<8x49xf32>
    %24 = tpu.matmul %22, %23, %cst_16 {dimension_numbers = #tpu.dot_dimension_numbers<[1], [0], [0], [1], [0, 0, 1, 1], [], []>} : vector<8x196xbf16>, vector<196x49xbf16>, vector<8x49xf32> -> vector<8x49xf32>
    %c0_17 = arith.constant 0 : index
    %c0_18 = arith.constant 0 : index
    %25 = vector.load %arg7[%c0_17, %c0_18] : memref<1x49xf32, #tpu.memory_space<vmem>>, vector<1x49xf32>
    %26 = vector.broadcast %25 : vector<1x49xf32> to vector<8x49xf32>
    %27 = arith.addf %24, %26 : vector<8x49xf32>
    %cst_19 = arith.constant 0.000000e+00 : f32
    %28 = vector.broadcast %cst_19 : f32 to vector<8x49xf32>
    %29 = arith.maximumf %27, %28 : vector<8x49xf32>
    %30 = arith.truncf %29 : vector<8x49xf32> to vector<8x49xbf16>
    %c0_20 = arith.constant 0 : index
    %c0_21 = arith.constant 0 : index
    %31 = vector.load %arg8[%c0_20, %c0_21] : memref<49x128xbf16, #tpu.memory_space<vmem>>, vector<49x128xbf16>
    %cst_22 = arith.constant dense<0.000000e+00> : vector<8x128xf32>
    %32 = tpu.matmul %30, %31, %cst_22 {dimension_numbers = #tpu.dot_dimension_numbers<[1], [0], [0], [1], [0, 0, 1, 1], [], []>} : vector<8x49xbf16>, vector<49x128xbf16>, vector<8x128xf32> -> vector<8x128xf32>
    %c0_23 = arith.constant 0 : index
    %c0_24 = arith.constant 0 : index
    %33 = vector.load %arg9[%c0_23, %c0_24] : memref<1x128xf32, #tpu.memory_space<vmem>>, vector<1x128xf32>
    %34 = vector.broadcast %33 : vector<1x128xf32> to vector<8x128xf32>
    %35 = arith.addf %32, %34 : vector<8x128xf32>
    %c0_25 = arith.constant 0 : index
    %c0_26 = arith.constant 0 : index
    %36 = vector.load %arg10[%c0_25, %c0_26] : memref<8x128xf32, #tpu.memory_space<vmem>>, vector<8x128xf32>
    tpu.vector_store %arg10[%c0_25, %c0_26], %35 {strides = array<i32>} : memref<8x128xf32, #tpu.memory_space<vmem>>, vector<8x128xf32>,
    return
  }
  func.func @transform_0(%arg0: i32) -> (i32, i32) {
    %c0_i32 = arith.constant 0 : i32
    %c0_i32_0 = arith.constant 0 : i32
    return %arg0, %c0_i32 : i32, i32
  }
  func.func @transform_1(%arg0: i32) -> (i32, i32) {
    %c0_i32 = arith.constant 0 : i32
    %c0_i32_0 = arith.constant 0 : i32
    %c0_i32_1 = arith.constant 0 : i32
    return %c0_i32, %c0_i32_0 : i32, i32
  }
  func.func @transform_2(%arg0: i32) -> (i32, i32) {
    %c0_i32 = arith.constant 0 : i32
    %c0_i32_0 = arith.constant 0 : i32
    %c0_i32_1 = arith.constant 0 : i32
    return %c0_i32, %c0_i32_0 : i32, i32
  }
  func.func @transform_3(%arg0: i32) -> (i32, i32) {
    %c0_i32 = arith.constant 0 : i32
    %c0_i32_0 = arith.constant 0 : i32
    %c0_i32_1 = arith.constant 0 : i32
    return %c0_i32, %c0_i32_0 : i32, i32
  }
  func.func @transform_4(%arg0: i32) -> (i32, i32) {
    %c0_i32 = arith.constant 0 : i32
    %c0_i32_0 = arith.constant 0 : i32
    %c0_i32_1 = arith.constant 0 : i32
    return %c0_i32, %c0_i32_0 : i32, i32
  }
  func.func @transform_5(%arg0: i32) -> (i32, i32) {
    %c0_i32 = arith.constant 0 : i32
    %c0_i32_0 = arith.constant 0 : i32
    %c0_i32_1 = arith.constant 0 : i32
    return %c0_i32, %c0_i32_0 : i32, i32
  }
  func.func @transform_6(%arg0: i32) -> (i32, i32) {
    %c0_i32 = arith.constant 0 : i32
    %c0_i32_0 = arith.constant 0 : i32
    %c0_i32_1 = arith.constant 0 : i32
    return %c0_i32, %c0_i32_0 : i32, i32
  }
  func.func @transform_7(%arg0: i32) -> (i32, i32) {
    %c0_i32 = arith.constant 0 : i32
    %c0_i32_0 = arith.constant 0 : i32
    %c0_i32_1 = arith.constant 0 : i32
    return %c0_i32, %c0_i32_0 : i32, i32
  }
  func.func @transform_8(%arg0: i32) -> (i32, i32) {
    %c0_i32 = arith.constant 0 : i32
    %c0_i32_0 = arith.constant 0 : i32
    %c0_i32_1 = arith.constant 0 : i32
    return %c0_i32, %c0_i32_0 : i32, i32
  }
  func.func @transform_9(%arg0: i32) -> (i32, i32) {
    %c0_i32 = arith.constant 0 : i32
    %c0_i32_0 = arith.constant 0 : i32
    return %arg0, %c0_i32 : i32, i32
  }
}

</mosaic_0001>

<llo_original>
// kernel: tpu_custom_call.1
$region0: #{tpu_custom_call.1}
  #allocation0 [shape = 'u32[]', space=smem, size = 0x4, offset = 0x4, fixed_abs, tag = 'smem constant byte address 0x4 - core index']
  #allocation1 [shape = 'u32[144,128]{1,0:T(1,128)}', space=vmem, size = 0x12000, scoped, tag = 'internal scratch']
  %s0 = inlined_call_operand.vmem [shape: f32[8,42], index: 0, kind: input, shape index: {}]
  %s1 = inlined_call_operand.vmem [shape: bf16[84,588], index: 1, kind: input, shape index: {}]
  %s2 = inlined_call_operand.vmem [shape: f32[1,588], index: 2, kind: input, shape index: {}]
  %s3 = inlined_call_operand.vmem [shape: bf16[588,196], index: 3, kind: input, shape index: {}]
  %s4 = inlined_call_operand.vmem [shape: f32[1,196], index: 4, kind: input, shape index: {}]
  %s5 = inlined_call_operand.vmem [shape: bf16[196,49], index: 5, kind: input, shape index: {}]
  %s6 = inlined_call_operand.vmem [shape: f32[1,49], index: 6, kind: input, shape index: {}]
  %s7 = inlined_call_operand.vmem [shape: bf16[49,128], index: 7, kind: input, shape index: {}]
  %s8 = inlined_call_operand.vmem [shape: f32[1,128], index: 8, kind: input, shape index: {}]
  %s9 = inlined_call_operand.hbm [shape: f32[8,128], index: 9, kind: output, shape index: {}]
  %s10 = sld [smem:[#allocation0]]
  $region46: #{tpu_custom_call.1} parent=0
    _
  %s12 = ssub.s32 1, %s10
  %s13 = scalar_select 0, %s12, %s10
  $region1: #{tpu_custom_call.1} parent=0
    #allocation2 [shape = 'u8[4096]{0}', space=vmem, size = 0x1000, scoped, tag = 'output window, operand 0, single buffered']
    #allocation3 [shape = 's32[1]{0}', space=sflag, size = 0x4, scoped, tag = 'scoped memory for tpu_custom_call.1']
    %14 = vsyncpa [#allocation3], 0
    // Predicated region
    $region2: #{tpu_custom_call.1} parent=1 // pred_check
      _
    $region3: #{tpu_custom_call.1} parent=1 // pred_check_branch
      %16 = sbr.rel (0) target = $region5
    $region4: #{tpu_custom_call.1} parent=1 // pred_region
      _
    $region5: #{tpu_custom_call.1} parent=1 // pred_fallthru
      _
    // Predicated region
    $region6: #{tpu_custom_call.1} parent=1 // pred_check
      _
    $region7: #{tpu_custom_call.1} parent=1 // pred_check_branch
      %18 = sbr.rel (0) target = $region9
    $region8: #{tpu_custom_call.1} parent=1 // pred_region
      _
    $region9: #{tpu_custom_call.1} parent=1 // pred_fallthru
      _
    // Predicated region
    $region10: #{tpu_custom_call.1} parent=1 // pred_check
      _
    $region11: #{tpu_custom_call.1} parent=1 // pred_check_branch
      %20 = sbr.rel (0) target = $region13
    $region12: #{tpu_custom_call.1} parent=1 // pred_region
      _
    $region13: #{tpu_custom_call.1} parent=1 // pred_fallthru
      _
    // Predicated region
    $region14: #{tpu_custom_call.1} parent=1 // pred_check
      _
    $region15: #{tpu_custom_call.1} parent=1 // pred_check_branch
      %22 = sbr.rel (0) target = $region17
    $region16: #{tpu_custom_call.1} parent=1 // pred_region
      _
    $region17: #{tpu_custom_call.1} parent=1 // pred_fallthru
      _
    // Predicated region
    $region18: #{tpu_custom_call.1} parent=1 // pred_check
      _
    $region19: #{tpu_custom_call.1} parent=1 // pred_check_branch
      %24 = sbr.rel (0) target = $region21
    $region20: #{tpu_custom_call.1} parent=1 // pred_region
      _
    $region21: #{tpu_custom_call.1} parent=1 // pred_fallthru
      _
    // Predicated region
    $region22: #{tpu_custom_call.1} parent=1 // pred_check
      _
    $region23: #{tpu_custom_call.1} parent=1 // pred_check_branch
      %26 = sbr.rel (0) target = $region25
    $region24: #{tpu_custom_call.1} parent=1 // pred_region
      _
    $region25: #{tpu_custom_call.1} parent=1 // pred_fallthru
      _
    // Predicated region
    $region26: #{tpu_custom_call.1} parent=1 // pred_check
      _
    $region27: #{tpu_custom_call.1} parent=1 // pred_check_branch
      %28 = sbr.rel (0) target = $region29
    $region28: #{tpu_custom_call.1} parent=1 // pred_region
      _
    $region29: #{tpu_custom_call.1} parent=1 // pred_fallthru
      _
    // Predicated region
    $region30: #{tpu_custom_call.1} parent=1 // pred_check
      _
    $region31: #{tpu_custom_call.1} parent=1 // pred_check_branch
      %30 = sbr.rel (0) target = $region33
    $region32: #{tpu_custom_call.1} parent=1 // pred_region
      _
    $region33: #{tpu_custom_call.1} parent=1 // pred_fallthru
      _
    // Predicated region
    $region34: #{tpu_custom_call.1} parent=1 // pred_check
      _
    $region35: #{tpu_custom_call.1} parent=1 // pred_check_branch
      %32 = sbr.rel (0) target = $region37
    $region36: #{tpu_custom_call.1} parent=1 // pred_region
      _
    $region37: #{tpu_custom_call.1} parent=1 // pred_fallthru
      _
    %v34 = vld [vmem:[%s0] sm:$0xff]
    %v35 = vsub.f32 0.0, %v34
    %v36 = vmax.f32 %v35, 0.0
    %38 = vrot.lane.b32.xlu0 %v36, 42
    %v39 = vpop.permute.xlu0 %38
    %vm41 = vcmask 343040
    %v42 = vsel %vm41, %v34, %v39
    %v43 = vpack.c.bf16 %v42, %v42
    %v44 = vld [vmem:[%s1] sm:$0xff]
    %v45 = vld [vmem:[%s1 + $0x8] sm:$0xff]
    %v46 = vld [vmem:[%s1 + $0x10] sm:$0xf]
    %v47 = vld [vmem:[%s1 + $0x14] sm:$0xff]
    %v48 = vld [vmem:[%s1 + $0x1c] sm:$0xff]
    %v49 = vld [vmem:[%s1 + $0x24] sm:$0xf]
    %v50 = vld [vmem:[%s1 + $0x28] sm:$0xff]
    %v51 = vld [vmem:[%s1 + $0x30] sm:$0xff]
    %v52 = vld [vmem:[%s1 + $0x38] sm:$0xf]
    %v53 = vld [vmem:[%s1 + $0x3c] sm:$0xff]
    %v54 = vld [vmem:[%s1 + $0x44] sm:$0xff]
    %v55 = vld [vmem:[%s1 + $0x4c] sm:$0xf]
    %v56 = vld [vmem:[%s1 + $0x50] sm:$0xff]
    %v57 = vld [vmem:[%s1 + $0x58] sm:$0xff]
    %v58 = vld [vmem:[%s1 + $0x60] sm:$0xf]
    %v59 = vld [vmem:[%s1 + $0x64] sm:$0xff]
    %v60 = vld [vmem:[%s1 + $0x6c] sm:$0xff]
    %v61 = vld [vmem:[%s1 + $0x74] sm:$0xf]
    %v62 = vld [vmem:[%s1 + $0x78] sm:$0xff]
    %v63 = vld [vmem:[%s1 + $0x80] sm:$0xff]
    %v64 = vld [vmem:[%s1 + $0x88] sm:$0xf]
    %v65 = vld [vmem:[%s1 + $0x8c] sm:$0xff]
    %v66 = vld [vmem:[%s1 + $0x94] sm:$0xff]
    %v67 = vld [vmem:[%s1 + $0x9c] sm:$0xf]
    %v68 = vld [vmem:[%s1 + $0xa0] sm:$0xff]
    %v69 = vld [vmem:[%s1 + $0xa8] sm:$0xff]
    %v70 = vld [vmem:[%s1 + $0xb0] sm:$0xf]
    %v71 = vld [vmem:[%s1 + $0xb4] sm:$0xff]
    %v72 = vld [vmem:[%s1 + $0xbc] sm:$0xff]
    %v73 = vld [vmem:[%s1 + $0xc4] sm:$0xf]
    %v74 = vld [vmem:[%s1 + $0xc8] sm:$0x33]
    %v75 = vld [vmem:[%s1 + $0xd0] sm:$0x33]
    %v76 = vld [vmem:[%s1 + $0xd8] sm:$0x3]
    %v77 = vld [vmem:[%s2] sm:$0x1f]
    %v79 = vlaneseq
    %v80 = vshrl.u32 %v79, 7
    %v81 = vsub.s32 0, %v80
    %v82 = vrot.slane %v77, %v81
    %v83 = vlaneseq
    %v84 = vshrl.u32 %v83, 7
    %v85 = vsub.s32 1, %v84
    %v86 = vrot.slane %v77, %v85
    %v87 = vlaneseq
    %v88 = vshrl.u32 %v87, 7
    %v89 = vsub.s32 2, %v88
    %v90 = vrot.slane %v77, %v89
    %v91 = vlaneseq
    %v92 = vshrl.u32 %v91, 7
    %v93 = vsub.s32 3, %v92
    %v94 = vrot.slane %v77, %v93
    %v95 = vlaneseq
    %v96 = vshrl.u32 %v95, 7
    %v97 = vsub.s32 4, %v96
    %v98 = vrot.slane %v77, %v97
    %v137 = vunpack.c.l.b16 %v44
    %v138 = vunpack.c.h.b16 %v44
    %v139 = vunpack.c.l.b16 %v45
    %v140 = vunpack.c.h.b16 %v45
    %v141 = vunpack.c.l.b16 %v46
    %v142 = vunpack.c.l.b16 %v47
    %v143 = vunpack.c.h.b16 %v47
    %v144 = vunpack.c.l.b16 %v48
    %v145 = vunpack.c.h.b16 %v48
    %v146 = vunpack.c.l.b16 %v49
    %v147 = vunpack.c.l.b16 %v50
    %v148 = vunpack.c.h.b16 %v50
    %v149 = vunpack.c.l.b16 %v51
    %v150 = vunpack.c.h.b16 %v51
    %v151 = vunpack.c.l.b16 %v52
    %v152 = vunpack.c.l.b16 %v53
    %v153 = vunpack.c.h.b16 %v53
    %v154 = vunpack.c.l.b16 %v54
    %v155 = vunpack.c.h.b16 %v54
    %v156 = vunpack.c.l.b16 %v55
    %v157 = vunpack.c.l.b16 %v56
    %v158 = vunpack.c.h.b16 %v56
    %v159 = vunpack.c.l.b16 %v57
    %v160 = vunpack.c.h.b16 %v57
    %v161 = vunpack.c.l.b16 %v58
    %v162 = vunpack.c.l.b16 %v59
    %v163 = vunpack.c.h.b16 %v59
    %v164 = vunpack.c.l.b16 %v60
    %v165 = vunpack.c.h.b16 %v60
    %v166 = vunpack.c.l.b16 %v61
    %v167 = vunpack.c.l.b16 %v62
    %v168 = vunpack.c.h.b16 %v62
    %v169 = vunpack.c.l.b16 %v63
    %v170 = vunpack.c.h.b16 %v63
    %v171 = vunpack.c.l.b16 %v64
    %v172 = vunpack.c.l.b16 %v65
    %v173 = vunpack.c.h.b16 %v65
    %v174 = vunpack.c.l.b16 %v66
    %v175 = vunpack.c.h.b16 %v66
    %v176 = vunpack.c.l.b16 %v67
    %v177 = vunpack.c.l.b16 %v68
    %v178 = vunpack.c.h.b16 %v68
    %v179 = vunpack.c.l.b16 %v69
    %v180 = vunpack.c.h.b16 %v69
    %v181 = vunpack.c.l.b16 %v70
    %v182 = vunpack.c.l.b16 %v71
    %v183 = vunpack.c.h.b16 %v71
    %v184 = vunpack.c.l.b16 %v72
    %v185 = vunpack.c.h.b16 %v72
    %v186 = vunpack.c.l.b16 %v73
    %v187 = vunpack.c.l.b16 %v74
    %v188 = vunpack.c.h.b16 %v74
    %v189 = vunpack.c.l.b16 %v75
    %v190 = vunpack.c.h.b16 %v75
    %v191 = vunpack.c.l.b16 %v76
    %v192 = vpack.c.b16 %v142, %v137
    %v193 = vpack.c.b16 %v143, %v138
    %v194 = vpack.c.b16 %v144, %v139
    %v195 = vpack.c.b16 %v145, %v140
    %v196 = vpack.c.b16 %v146, %v141
    %v197 = vpack.c.b16 %v152, %v147
    %v198 = vpack.c.b16 %v153, %v148
    %v199 = vpack.c.b16 %v154, %v149
    %v200 = vpack.c.b16 %v155, %v150
    %v201 = vpack.c.b16 %v156, %v151
    %v202 = vpack.c.b16 %v162, %v157
    %v203 = vpack.c.b16 %v163, %v158
    %v204 = vpack.c.b16 %v164, %v159
    %v205 = vpack.c.b16 %v165, %v160
    %v206 = vpack.c.b16 %v166, %v161
    %v207 = vpack.c.b16 %v172, %v167
    %v208 = vpack.c.b16 %v173, %v168
    %v209 = vpack.c.b16 %v174, %v169
    %v210 = vpack.c.b16 %v175, %v170
    %v211 = vpack.c.b16 %v176, %v171
    %v212 = vpack.c.b16 %v182, %v177
    %v213 = vpack.c.b16 %v183, %v178
    %v214 = vpack.c.b16 %v184, %v179
    %v215 = vpack.c.b16 %v185, %v180
    %v216 = vpack.c.b16 %v186, %v181
    %v217 = vpack.c.b16 %v187, %v187
    %v218 = vpack.c.b16 %v188, %v188
    %v219 = vpack.c.b16 %v189, %v189
    %v220 = vpack.c.b16 %v190, %v190
    %v221 = vpack.c.b16 %v191, %v191
    %vm247 = vcmask 687104
    %v249 = vsel %vm247, %v43, 0
    %vm251 = vcmask 1041408
    %v253 = vsel %vm251, %v217, 0
    %v256 = vsel %vm251, %v218, 0
    %v259 = vsel %vm251, %v219, 0
    %v262 = vsel %vm251, %v220, 0
    %v265 = vsel %vm251, %v221, 0
    %267 = vmatprep.subr.bf16.mxu0 %v193
    %268 = vmatpush1.bf16.msra.mxu0 %v192
    %269 = vmatprep.subr.bf16.mxu0 %v198
    %270 = vmatpush1.bf16.msra.mxu0 %v197
    %271 = vmatprep.subr.bf16.mxu0 %v203
    %272 = vmatpush1.bf16.msra.mxu0 %v202
    %273 = vmatprep.subr.bf16.mxu0 %v208
    %274 = vmatpush1.bf16.msra.mxu0 %v207
    %275 = vmatprep.subr.bf16.mxu0 %v213
    %276 = vmatpush1.bf16.msra.mxu0 %v212
    %277 = vmatprep.subr.bf16.mxu0 %v256
    %278 = vmatpush1.bf16.msra.mxu0 %v253
    %279 = vmatprep.subr.bf16.mxu0 0
    %280 = vmatpush1.bf16.msra.mxu0 0
    %281 = vmatprep.subr.bf16.mxu0 0
    %282 = vmatpush1.bf16.msra.mxu0 0
    %283 = vmatprep.subr.bf16.mxu0 0
    %284 = vmatpush1.bf16.msra.mxu0 0
    %285 = vmatprep.subr.bf16.mxu0 0
    %286 = vmatpush1.bf16.msra.mxu0 0
    %287 = vmatprep.subr.bf16.mxu0 0
    %288 = vmatpush1.bf16.msra.mxu0 0
    %289 = vmatprep.subr.bf16.mxu0 0
    %290 = vmatpush1.bf16.msra.mxu0 0
    %291 = vmatprep.subr.bf16.mxu0 0
    %292 = vmatpush1.bf16.msra.mxu0 0
    %293 = vmatprep.subr.bf16.mxu0 0
    %294 = vmatpush1.bf16.msra.mxu0 0
    %295 = vmatprep.subr.bf16.mxu0 0
    %296 = vmatpush1.bf16.msra.mxu0 0
    %297 = vmatprep.subr.bf16.mxu0 0
    %298 = vmatpush1.bf16.msra.mxu0 0
    %299 = vmatprep.mubr.bf16.mxu0 0
    %300 = vmatmul.mubr.bf16.gmra.mrb[0].mxu0 %v249
    %v301 = vpop.f32.mrb[0].mxu0
    %v302 = vadd.f32 %v82, %v301
    %v303 = vpop.f32.mrb[0].mxu0
    %v304 = vadd.f32 %v86, %v303
    %v305 = vpop.f32.mrb[0].mxu0
    %v306 = vpop.f32.mrb[0].mxu0
    %307 = vdwg.mxu0
    %308 = vmatprep.subr.bf16.mxu0 %v195
    %309 = vmatpush1.bf16.msra.mxu0 %v194
    %310 = vmatprep.subr.bf16.mxu0 %v200
    %311 = vmatpush1.bf16.msra.mxu0 %v199
    %312 = vmatprep.subr.bf16.mxu0 %v205
    %313 = vmatpush1.bf16.msra.mxu0 %v204
    %314 = vmatprep.subr.bf16.mxu0 %v210
    %315 = vmatpush1.bf16.msra.mxu0 %v209
    %316 = vmatprep.subr.bf16.mxu0 %v215
    %317 = vmatpush1.bf16.msra.mxu0 %v214
    %318 = vmatprep.subr.bf16.mxu0 %v262
    %319 = vmatpush1.bf16.msra.mxu0 %v259
    %320 = vmatprep.subr.bf16.mxu0 0
    %321 = vmatpush1.bf16.msra.mxu0 0
    %322 = vmatprep.subr.bf16.mxu0 0
    %323 = vmatpush1.bf16.msra.mxu0 0
    %324 = vmatprep.subr.bf16.mxu0 0
    %325 = vmatpush1.bf16.msra.mxu0 0
    %326 = vmatprep.subr.bf16.mxu0 0
    %327 = vmatpush1.bf16.msra.mxu0 0
    %328 = vmatprep.subr.bf16.mxu0 0
    %329 = vmatpush1.bf16.msra.mxu0 0
    %330 = vmatprep.subr.bf16.mxu0 0
    %331 = vmatpush1.bf16.msra.mxu0 0
    %332 = vmatprep.subr.bf16.mxu0 0
    %333 = vmatpush1.bf16.msra.mxu0 0
    %334 = vmatprep.subr.bf16.mxu0 0
    %335 = vmatpush1.bf16.msra.mxu0 0
    %336 = vmatprep.subr.bf16.mxu0 0
    %337 = vmatpush1.bf16.msra.mxu0 0
    %338 = vmatprep.subr.bf16.mxu0 0
    %339 = vmatpush1.bf16.msra.mxu0 0
    %340 = vmatprep.mubr.bf16.mxu0 0
    %341 = vmatmul.mubr.bf16.gmra.mrb[0].mxu0 %v249
    %v342 = vpop.f32.mrb[0].mxu0
    %v343 = vadd.f32 %v90, %v342
    %v344 = vpop.f32.mrb[0].mxu0
    %v345 = vadd.f32 %v94, %v344
    %v346 = vpop.f32.mrb[0].mxu0
    %v347 = vpop.f32.mrb[0].mxu0
    %348 = vdwg.mxu0
    %349 = vmatprep.subr.bf16.mxu0 0
    %350 = vmatpush1.bf16.msra.mxu0 %v196
    %351 = vmatprep.subr.bf16.mxu0 0
    %352 = vmatpush1.bf16.msra.mxu0 %v201
    %353 = vmatprep.subr.bf16.mxu0 0
    %354 = vmatpush1.bf16.msra.mxu0 %v206
    %355 = vmatprep.subr.bf16.mxu0 0
    %356 = vmatpush1.bf16.msra.mxu0 %v211
    %357 = vmatprep.subr.bf16.mxu0 0
    %358 = vmatpush1.bf16.msra.mxu0 %v216
    %359 = vmatprep.subr.bf16.mxu0 0
    %360 = vmatpush1.bf16.msra.mxu0 %v265
    %361 = vmatprep.subr.bf16.mxu0 0
    %362 = vmatpush1.bf16.msra.mxu0 0
    %363 = vmatprep.subr.bf16.mxu0 0
    %364 = vmatpush1.bf16.msra.mxu0 0
    %365 = vmatprep.subr.bf16.mxu0 0
    %366 = vmatpush1.bf16.msra.mxu0 0
    %367 = vmatprep.subr.bf16.mxu0 0
    %368 = vmatpush1.bf16.msra.mxu0 0
    %369 = vmatprep.subr.bf16.mxu0 0
    %370 = vmatpush1.bf16.msra.mxu0 0
    %371 = vmatprep.subr.bf16.mxu0 0
    %372 = vmatpush1.bf16.msra.mxu0 0
    %373 = vmatprep.subr.bf16.mxu0 0
    %374 = vmatpush1.bf16.msra.mxu0 0
    %375 = vmatprep.subr.bf16.mxu0 0
    %376 = vmatpush1.bf16.msra.mxu0 0
    %377 = vmatprep.subr.bf16.mxu0 0
    %378 = vmatpush1.bf16.msra.mxu0 0
    %379 = vmatprep.subr.bf16.mxu0 0
    %380 = vmatpush1.bf16.msra.mxu0 0
    %381 = vmatprep.mubr.bf16.mxu0 0
    %382 = vmatmul.mubr.bf16.gmra.mrb[0].mxu0 %v249
    %v383 = vpop.f32.mrb[0].mxu0
    %v384 = vadd.f32 %v98, %v383
    %v385 = vpop.f32.mrb[0].mxu0
    %v386 = vpop.f32.mrb[0].mxu0
    %v387 = vpop.f32.mrb[0].mxu0
    %388 = vdwg.mxu0
    %v389 = vmax.f32 %v302, 0.0
    %v390 = vmax.f32 %v304, 0.0
    %v391 = vmax.f32 %v343, 0.0
    %v392 = vmax.f32 %v345, 0.0
    %v393 = vmax.f32 %v384, 0.0
    %v394 = vpack.c.bf16 %v389, %v389
    %v395 = vpack.c.bf16 %v390, %v390
    %v396 = vpack.c.bf16 %v391, %v391
    %v397 = vpack.c.bf16 %v392, %v392
    %v398 = vpack.c.bf16 %v393, %v393
    %v399 = vld [vmem:[%s3] sm:$0xff]
    %v400 = vld [vmem:[%s3 + $0x8] sm:$0xff]
    %v401 = vld [vmem:[%s3 + $0x10] sm:$0xff]
    %v402 = vld [vmem:[%s3 + $0x18] sm:$0xff]
    %v403 = vld [vmem:[%s3 + $0x20] sm:$0xff]
    %v404 = vld [vmem:[%s3 + $0x28] sm:$0xff]
    %v405 = vld [vmem:[%s3 + $0x30] sm:$0xff]
    %v406 = vld [vmem:[%s3 + $0x38] sm:$0xff]
    %v407 = vld [vmem:[%s3 + $0x40] sm:$0xff]
    %v408 = vld [vmem:[%s3 + $0x48] sm:$0xff]
    %v409 = vld [vmem:[%s3 + $0x50] sm:$0xff]
    %v410 = vld [vmem:[%s3 + $0x58] sm:$0xff]
    %v411 = vld [vmem:[%s3 + $0x60] sm:$0xff]
    %v412 = vld [vmem:[%s3 + $0x68] sm:$0xff]
    %v413 = vld [vmem:[%s3 + $0x70] sm:$0xff]
    %v414 = vld [vmem:[%s3 + $0x78] sm:$0xff]
    %v415 = vld [vmem:[%s3 + $0x80] sm:$0xff]
    %v416 = vld [vmem:[%s3 + $0x88] sm:$0xff]
    %v417 = vld [vmem:[%s3 + $0x90] sm:$0xff]
    %v418 = vld [vmem:[%s3 + $0x98] sm:$0xff]
    %v419 = vld [vmem:[%s3 + $0xa0] sm:$0xff]
    %v420 = vld [vmem:[%s3 + $0xa8] sm:$0xff]
    %v421 = vld [vmem:[%s3 + $0xb0] sm:$0xff]
    %v422 = vld [vmem:[%s3 + $0xb8] sm:$0xff]
    %v423 = vld [vmem:[%s3 + $0xc0] sm:$0xff]
    %v424 = vld [vmem:[%s3 + $0xc8] sm:$0xff]
    %v425 = vld [vmem:[%s3 + $0xd0] sm:$0xff]
    %v426 = vld [vmem:[%s3 + $0xd8] sm:$0xff]
    %v427 = vld [vmem:[%s3 + $0xe0] sm:$0xff]
    %v428 = vld [vmem:[%s3 + $0xe8] sm:$0xff]
    %v429 = vld [vmem:[%s3 + $0xf0] sm:$0xff]
    %v430 = vld [vmem:[%s3 + $0xf8] sm:$0xff]
    %v431 = vld [vmem:[%s3 + $0x100] sm:$0xff]
    %v432 = vld [vmem:[%s3 + $0x108] sm:$0xff]
    %v433 = vld [vmem:[%s3 + $0x110] sm:$0xff]
    %v434 = vld [vmem:[%s3 + $0x118] sm:$0xff]
    %v435 = vld [vmem:[%s3 + $0x120] sm:$0xff]
    %v436 = vld [vmem:[%s3 + $0x128] sm:$0xff]
    %v437 = vld [vmem:[%s3 + $0x130] sm:$0xff]
    %v438 = vld [vmem:[%s3 + $0x138] sm:$0xff]
    %v439 = vld [vmem:[%s3 + $0x140] sm:$0xff]
    %v440 = vld [vmem:[%s3 + $0x148] sm:$0xff]
    %v441 = vld [vmem:[%s3 + $0x150] sm:$0xff]
    %v442 = vld [vmem:[%s3 + $0x158] sm:$0xff]
    %v443 = vld [vmem:[%s3 + $0x160] sm:$0xff]
    %v444 = vld [vmem:[%s3 + $0x168] sm:$0xff]
    %v445 = vld [vmem:[%s3 + $0x170] sm:$0xff]
    %v446 = vld [vmem:[%s3 + $0x178] sm:$0xff]
    %v447 = vld [vmem:[%s3 + $0x180] sm:$0xff]
    %v448 = vld [vmem:[%s3 + $0x188] sm:$0xff]
    %v449 = vld [vmem:[%s3 + $0x190] sm:$0xff]
    %v450 = vld [vmem:[%s3 + $0x198] sm:$0xff]
    %v451 = vld [vmem:[%s3 + $0x1a0] sm:$0xff]
    %v452 = vld [vmem:[%s3 + $0x1a8] sm:$0xff]
    %v453 = vld [vmem:[%s3 + $0x1b0] sm:$0xff]
    %v454 = vld [vmem:[%s3 + $0x1b8] sm:$0xff]
    %v455 = vld [vmem:[%s3 + $0x1c0] sm:$0xff]
    %v456 = vld [vmem:[%s3 + $0x1c8] sm:$0xff]
    %v457 = vld [vmem:[%s3 + $0x1d0] sm:$0xff]
    %v458 = vld [vmem:[%s3 + $0x1d8] sm:$0xff]
    %v459 = vld [vmem:[%s3 + $0x1e0] sm:$0xff]
    %v460 = vld [vmem:[%s3 + $0x1e8] sm:$0xff]
    %v461 = vld [vmem:[%s3 + $0x1f0] sm:$0xff]
    %v462 = vld [vmem:[%s3 + $0x1f8] sm:$0xff]
    %v463 = vld [vmem:[%s3 + $0x200] sm:$0xff]
    %v464 = vld [vmem:[%s3 + $0x208] sm:$0xff]
    %v465 = vld [vmem:[%s3 + $0x210] sm:$0xff]
    %v466 = vld [vmem:[%s3 + $0x218] sm:$0xff]
    %v467 = vld [vmem:[%s3 + $0x220] sm:$0xff]
    %v468 = vld [vmem:[%s3 + $0x228] sm:$0xff]
    %v469 = vld [vmem:[%s3 + $0x230] sm:$0xff]
    %v470 = vld [vmem:[%s3 + $0x238] sm:$0xff]
    %v471 = vld [vmem:[%s3 + $0x240] sm:$0xff]
    %v472 = vld [vmem:[%s3 + $0x248] sm:$0x33]
    %v473 = vld [vmem:[%s4] sm:$0x3]
    %v475 = vlaneseq
    %v476 = vshrl.u32 %v475, 7
    %v477 = vsub.s32 0, %v476
    %v478 = vrot.slane %v473, %v477
    %v479 = vlaneseq
    %v480 = vshrl.u32 %v479, 7
    %v481 = vsub.s32 1, %v480
    %v482 = vrot.slane %v473, %v481
    %v559 = vunpack.c.l.b16 %v399
    %v560 = vunpack.c.h.b16 %v399
    %v561 = vunpack.c.l.b16 %v400
    %v562 = vunpack.c.h.b16 %v400
    %v563 = vunpack.c.l.b16 %v401
    %v564 = vunpack.c.h.b16 %v401
    %v565 = vunpack.c.l.b16 %v402
    %v566 = vunpack.c.h.b16 %v402
    %v567 = vunpack.c.l.b16 %v403
    %v568 = vunpack.c.h.b16 %v403
    %v569 = vunpack.c.l.b16 %v404
    %v570 = vunpack.c.h.b16 %v404
    %v571 = vunpack.c.l.b16 %v405
    %v572 = vunpack.c.h.b16 %v405
    %v573 = vunpack.c.l.b16 %v406
    %v574 = vunpack.c.h.b16 %v406
    %v575 = vunpack.c.l.b16 %v407
    %v576 = vunpack.c.h.b16 %v407
    %v577 = vunpack.c.l.b16 %v408
    %v578 = vunpack.c.h.b16 %v408
    %v579 = vunpack.c.l.b16 %v409
    %v580 = vunpack.c.h.b16 %v409
    %v581 = vunpack.c.l.b16 %v410
    %v582 = vunpack.c.h.b16 %v410
    %v583 = vunpack.c.l.b16 %v411
    %v584 = vunpack.c.h.b16 %v411
    %v585 = vunpack.c.l.b16 %v412
    %v586 = vunpack.c.h.b16 %v412
    %v587 = vunpack.c.l.b16 %v413
    %v588 = vunpack.c.h.b16 %v413
    %v589 = vunpack.c.l.b16 %v414
    %v590 = vunpack.c.h.b16 %v414
    %v591 = vunpack.c.l.b16 %v415
    %v592 = vunpack.c.h.b16 %v415
    %v593 = vunpack.c.l.b16 %v416
    %v594 = vunpack.c.h.b16 %v416
    %v595 = vunpack.c.l.b16 %v417
    %v596 = vunpack.c.h.b16 %v417
    %v597 = vunpack.c.l.b16 %v418
    %v598 = vunpack.c.h.b16 %v418
    %v599 = vunpack.c.l.b16 %v419
    %v600 = vunpack.c.h.b16 %v419
    %v601 = vunpack.c.l.b16 %v420
    %v602 = vunpack.c.h.b16 %v420
    %v603 = vunpack.c.l.b16 %v421
    %v604 = vunpack.c.h.b16 %v421
    %v605 = vunpack.c.l.b16 %v422
    %v606 = vunpack.c.h.b16 %v422
    %v607 = vunpack.c.l.b16 %v423
    %v608 = vunpack.c.h.b16 %v423
    %v609 = vunpack.c.l.b16 %v424
    %v610 = vunpack.c.h.b16 %v424
    %v611 = vunpack.c.l.b16 %v425
    %v612 = vunpack.c.h.b16 %v425
    %v613 = vunpack.c.l.b16 %v426
    %v614 = vunpack.c.h.b16 %v426
    %v615 = vunpack.c.l.b16 %v427
    %v616 = vunpack.c.h.b16 %v427
    %v617 = vunpack.c.l.b16 %v428
    %v618 = vunpack.c.h.b16 %v428
    %v619 = vunpack.c.l.b16 %v429
    %v620 = vunpack.c.h.b16 %v429
    %v621 = vunpack.c.l.b16 %v430
    %v622 = vunpack.c.h.b16 %v430
    %v623 = vunpack.c.l.b16 %v431
    %v624 = vunpack.c.h.b16 %v431
    %v625 = vunpack.c.l.b16 %v432
    %v626 = vunpack.c.h.b16 %v432
    %v627 = vunpack.c.l.b16 %v433
    %v628 = vunpack.c.h.b16 %v433
    %v629 = vunpack.c.l.b16 %v434
    %v630 = vunpack.c.h.b16 %v434
    %v631 = vunpack.c.l.b16 %v435
    %v632 = vunpack.c.h.b16 %v435
    %v633 = vunpack.c.l.b16 %v436
    %v634 = vunpack.c.h.b16 %v436
    %v635 = vunpack.c.l.b16 %v437
    %v636 = vunpack.c.h.b16 %v437
    %v637 = vunpack.c.l.b16 %v438
    %v638 = vunpack.c.h.b16 %v438
    %v639 = vunpack.c.l.b16 %v439
    %v640 = vunpack.c.h.b16 %v439
    %v641 = vunpack.c.l.b16 %v440
    %v642 = vunpack.c.h.b16 %v440
    %v643 = vunpack.c.l.b16 %v441
    %v644 = vunpack.c.h.b16 %v441
    %v645 = vunpack.c.l.b16 %v442
    %v646 = vunpack.c.h.b16 %v442
    %v647 = vunpack.c.l.b16 %v443
    %v648 = vunpack.c.h.b16 %v443
    %v649 = vunpack.c.l.b16 %v444
    %v650 = vunpack.c.h.b16 %v444
    %v651 = vunpack.c.l.b16 %v445
    %v652 = vunpack.c.h.b16 %v445
    %v653 = vunpack.c.l.b16 %v446
    %v654 = vunpack.c.h.b16 %v446
    %v655 = vunpack.c.l.b16 %v447
    %v656 = vunpack.c.h.b16 %v447
    %v657 = vunpack.c.l.b16 %v448
    %v658 = vunpack.c.h.b16 %v448
    %v659 = vunpack.c.l.b16 %v449
    %v660 = vunpack.c.h.b16 %v449
    %v661 = vunpack.c.l.b16 %v450
    %v662 = vunpack.c.h.b16 %v450
    %v663 = vunpack.c.l.b16 %v451
    %v664 = vunpack.c.h.b16 %v451
    %v665 = vunpack.c.l.b16 %v452
    %v666 = vunpack.c.h.b16 %v452
    %v667 = vunpack.c.l.b16 %v453
    %v668 = vunpack.c.h.b16 %v453
    %v669 = vunpack.c.l.b16 %v454
    %v670 = vunpack.c.h.b16 %v454
    %v671 = vunpack.c.l.b16 %v455
    %v672 = vunpack.c.h.b16 %v455
    %v673 = vunpack.c.l.b16 %v456
    %v674 = vunpack.c.h.b16 %v456
    %v675 = vunpack.c.l.b16 %v457
    %v676 = vunpack.c.h.b16 %v457
    %v677 = vunpack.c.l.b16 %v458
    %v678 = vunpack.c.h.b16 %v458
    %v679 = vunpack.c.l.b16 %v459
    %v680 = vunpack.c.h.b16 %v459
    %v681 = vunpack.c.l.b16 %v460
    %v682 = vunpack.c.h.b16 %v460
    %v683 = vunpack.c.l.b16 %v461
    %v684 = vunpack.c.h.b16 %v461
    %v685 = vunpack.c.l.b16 %v462
    %v686 = vunpack.c.h.b16 %v462
    %v687 = vunpack.c.l.b16 %v463
    %v688 = vunpack.c.h.b16 %v463
    %v689 = vunpack.c.l.b16 %v464
    %v690 = vunpack.c.h.b16 %v464
    %v691 = vunpack.c.l.b16 %v465
    %v692 = vunpack.c.h.b16 %v465
    %v693 = vunpack.c.l.b16 %v466
    %v694 = vunpack.c.h.b16 %v466
    %v695 = vunpack.c.l.b16 %v467
    %v696 = vunpack.c.h.b16 %v467
    %v697 = vunpack.c.l.b16 %v468
    %v698 = vunpack.c.h.b16 %v468
    %v699 = vunpack.c.l.b16 %v469
    %v700 = vunpack.c.h.b16 %v469
    %v701 = vunpack.c.l.b16 %v470
    %v702 = vunpack.c.h.b16 %v470
    %v703 = vunpack.c.l.b16 %v471
    %v704 = vunpack.c.h.b16 %v471
    %v705 = vunpack.c.l.b16 %v472
    %v706 = vunpack.c.h.b16 %v472
    %v707 = vpack.c.b16 %v561, %v559
    %v708 = vpack.c.b16 %v562, %v560
    %v709 = vpack.c.b16 %v565, %v563
    %v710 = vpack.c.b16 %v566, %v564
    %v711 = vpack.c.b16 %v569, %v567
    %v712 = vpack.c.b16 %v570, %v568
    %v713 = vpack.c.b16 %v573, %v571
    %v714 = vpack.c.b16 %v574, %v572
    %v715 = vpack.c.b16 %v577, %v575
    %v716 = vpack.c.b16 %v578, %v576
    %v717 = vpack.c.b16 %v581, %v579
    %v718 = vpack.c.b16 %v582, %v580
    %v719 = vpack.c.b16 %v585, %v583
    %v720 = vpack.c.b16 %v586, %v584
    %v721 = vpack.c.b16 %v589, %v587
    %v722 = vpack.c.b16 %v590, %v588
    %v723 = vpack.c.b16 %v593, %v591
    %v724 = vpack.c.b16 %v594, %v592
    %v725 = vpack.c.b16 %v597, %v595
    %v726 = vpack.c.b16 %v598, %v596
    %v727 = vpack.c.b16 %v601, %v599
    %v728 = vpack.c.b16 %v602, %v600
    %v729 = vpack.c.b16 %v605, %v603
    %v730 = vpack.c.b16 %v606, %v604
    %v731 = vpack.c.b16 %v609, %v607
    %v732 = vpack.c.b16 %v610, %v608
    %v733 = vpack.c.b16 %v613, %v611
    %v734 = vpack.c.b16 %v614, %v612
    %v735 = vpack.c.b16 %v617, %v615
    %v736 = vpack.c.b16 %v618, %v616
    %v737 = vpack.c.b16 %v621, %v619
    %v738 = vpack.c.b16 %v622, %v620
    %v739 = vpack.c.b16 %v625, %v623
    %v740 = vpack.c.b16 %v626, %v624
    %v741 = vpack.c.b16 %v629, %v627
    %v742 = vpack.c.b16 %v630, %v628
    %v743 = vpack.c.b16 %v633, %v631
    %v744 = vpack.c.b16 %v634, %v632
    %v745 = vpack.c.b16 %v637, %v635
    %v746 = vpack.c.b16 %v638, %v636
    %v747 = vpack.c.b16 %v641, %v639
    %v748 = vpack.c.b16 %v642, %v640
    %v749 = vpack.c.b16 %v645, %v643
    %v750 = vpack.c.b16 %v646, %v644
    %v751 = vpack.c.b16 %v649, %v647
    %v752 = vpack.c.b16 %v650, %v648
    %v753 = vpack.c.b16 %v653, %v651
    %v754 = vpack.c.b16 %v654, %v652
    %v755 = vpack.c.b16 %v657, %v655
    %v756 = vpack.c.b16 %v658, %v656
    %v757 = vpack.c.b16 %v661, %v659
    %v758 = vpack.c.b16 %v662, %v660
    %v759 = vpack.c.b16 %v665, %v663
    %v760 = vpack.c.b16 %v666, %v664
    %v761 = vpack.c.b16 %v669, %v667
    %v762 = vpack.c.b16 %v670, %v668
    %v763 = vpack.c.b16 %v673, %v671
    %v764 = vpack.c.b16 %v674, %v672
    %v765 = vpack.c.b16 %v677, %v675
    %v766 = vpack.c.b16 %v678, %v676
    %v767 = vpack.c.b16 %v681, %v679
    %v768 = vpack.c.b16 %v682, %v680
    %v769 = vpack.c.b16 %v685, %v683
    %v770 = vpack.c.b16 %v686, %v684
    %v771 = vpack.c.b16 %v689, %v687
    %v772 = vpack.c.b16 %v690, %v688
    %v773 = vpack.c.b16 %v693, %v691
    %v774 = vpack.c.b16 %v694, %v692
    %v775 = vpack.c.b16 %v697, %v695
    %v776 = vpack.c.b16 %v698, %v696
    %v777 = vpack.c.b16 %v701, %v699
    %v778 = vpack.c.b16 %v702, %v700
    %v779 = vpack.c.b16 %v705, %v703
    %v780 = vpack.c.b16 %v706, %v704
    %vm853 = vcmask 621568
    %v855 = vsel %vm853, %v398, 0
    %vm857 = vcmask 1045504
    %v859 = vsel %vm857, %v779, 0
    %v862 = vsel %vm857, %v780, 0
    %864 = vmatprep.subr.bf16.mxu0 %v708
    %865 = vmatpush1.bf16.msra.mxu0 %v707
    %866 = vmatprep.subr.bf16.mxu0 %v710
    %867 = vmatpush1.bf16.msra.mxu0 %v709
    %868 = vmatprep.subr.bf16.mxu0 %v712
    %869 = vmatpush1.bf16.msra.mxu0 %v711
    %870 = vmatprep.subr.bf16.mxu0 %v714
    %871 = vmatpush1.bf16.msra.mxu0 %v713
    %872 = vmatprep.subr.bf16.mxu0 %v716
    %873 = vmatpush1.bf16.msra.mxu0 %v715
    %874 = vmatprep.subr.bf16.mxu0 %v718
    %875 = vmatpush1.bf16.msra.mxu0 %v717
    %876 = vmatprep.subr.bf16.mxu0 %v720
    %877 = vmatpush1.bf16.msra.mxu0 %v719
    %878 = vmatprep.subr.bf16.mxu0 %v722
    %879 = vmatpush1.bf16.msra.mxu0 %v721
    %880 = vmatprep.subr.bf16.mxu0 %v724
    %881 = vmatpush1.bf16.msra.mxu0 %v723
    %882 = vmatprep.subr.bf16.mxu0 %v726
    %883 = vmatpush1.bf16.msra.mxu0 %v725
    %884 = vmatprep.subr.bf16.mxu0 %v728
    %885 = vmatpush1.bf16.msra.mxu0 %v727
    %886 = vmatprep.subr.bf16.mxu0 %v730
    %887 = vmatpush1.bf16.msra.mxu0 %v729
    %888 = vmatprep.subr.bf16.mxu0 %v732
    %889 = vmatpush1.bf16.msra.mxu0 %v731
    %890 = vmatprep.subr.bf16.mxu0 %v734
    %891 = vmatpush1.bf16.msra.mxu0 %v733
    %892 = vmatprep.subr.bf16.mxu0 %v736
    %893 = vmatpush1.bf16.msra.mxu0 %v735
    %894 = vmatprep.subr.bf16.mxu0 %v738
    %895 = vmatpush1.bf16.msra.mxu0 %v737
    %896 = vmatprep.mubr.bf16.mxu0 %v395
    %897 = vmatmul.mubr.bf16.gmra.mrb[0].mxu0 %v394
    %v898 = vpop.f32.mrb[0].mxu0
    %v899 = vadd.f32 %v478, %v898
    %v900 = vpop.f32.mrb[0].mxu0
    %v901 = vadd.f32 %v482, %v900
    %v902 = vpop.f32.mrb[0].mxu0
    %v903 = vpop.f32.mrb[0].mxu0
    %904 = vdwg.mxu0
    %905 = vmatprep.subr.bf16.mxu0 %v740
    %906 = vmatpush1.bf16.msra.mxu0 %v739
    %907 = vmatprep.subr.bf16.mxu0 %v742
    %908 = vmatpush1.bf16.msra.mxu0 %v741
    %909 = vmatprep.subr.bf16.mxu0 %v744
    %910 = vmatpush1.bf16.msra.mxu0 %v743
    %911 = vmatprep.subr.bf16.mxu0 %v746
    %912 = vmatpush1.bf16.msra.mxu0 %v745
    %913 = vmatprep.subr.bf16.mxu0 %v748
    %914 = vmatpush1.bf16.msra.mxu0 %v747
    %915 = vmatprep.subr.bf16.mxu0 %v750
    %916 = vmatpush1.bf16.msra.mxu0 %v749
    %917 = vmatprep.subr.bf16.mxu0 %v752
    %918 = vmatpush1.bf16.msra.mxu0 %v751
    %919 = vmatprep.subr.bf16.mxu0 %v754
    %920 = vmatpush1.bf16.msra.mxu0 %v753
    %921 = vmatprep.subr.bf16.mxu0 %v756
    %922 = vmatpush1.bf16.msra.mxu0 %v755
    %923 = vmatprep.subr.bf16.mxu0 %v758
    %924 = vmatpush1.bf16.msra.mxu0 %v757
    %925 = vmatprep.subr.bf16.mxu0 %v760
    %926 = vmatpush1.bf16.msra.mxu0 %v759
    %927 = vmatprep.subr.bf16.mxu0 %v762
    %928 = vmatpush1.bf16.msra.mxu0 %v761
    %929 = vmatprep.subr.bf16.mxu0 %v764
    %930 = vmatpush1.bf16.msra.mxu0 %v763
    %931 = vmatprep.subr.bf16.mxu0 %v766
    %932 = vmatpush1.bf16.msra.mxu0 %v765
    %933 = vmatprep.subr.bf16.mxu0 %v768
    %934 = vmatpush1.bf16.msra.mxu0 %v767
    %935 = vmatprep.subr.bf16.mxu0 %v770
    %936 = vmatpush1.bf16.msra.mxu0 %v769
    %937 = vmatprep.mubr.bf16.mxu0 %v397
    %938 = vmatmul.mubr.bf16.gmra.mrb[0].mxu0 %v396
    %v939 = vpop.f32.mrb[0].mxu0
    %v940 = vadd.f32 %v899, %v939
    %v941 = vpop.f32.mrb[0].mxu0
    %v942 = vadd.f32 %v901, %v941
    %v943 = vpop.f32.mrb[0].mxu0
    %v944 = vpop.f32.mrb[0].mxu0
    %945 = vdwg.mxu0
    %946 = vmatprep.subr.bf16.mxu0 %v772
    %947 = vmatpush1.bf16.msra.mxu0 %v771
    %948 = vmatprep.subr.bf16.mxu0 %v774
    %949 = vmatpush1.bf16.msra.mxu0 %v773
    %950 = vmatprep.subr.bf16.mxu0 %v776
    %951 = vmatpush1.bf16.msra.mxu0 %v775
    %952 = vmatprep.subr.bf16.mxu0 %v778
    %953 = vmatpush1.bf16.msra.mxu0 %v777
    %954 = vmatprep.subr.bf16.mxu0 %v862
    %955 = vmatpush1.bf16.msra.mxu0 %v859
    %956 = vmatprep.subr.bf16.mxu0 0
    %957 = vmatpush1.bf16.msra.mxu0 0
    %958 = vmatprep.subr.bf16.mxu0 0
    %959 = vmatpush1.bf16.msra.mxu0 0
    %960 = vmatprep.subr.bf16.mxu0 0
    %961 = vmatpush1.bf16.msra.mxu0 0
    %962 = vmatprep.subr.bf16.mxu0 0
    %963 = vmatpush1.bf16.msra.mxu0 0
    %964 = vmatprep.subr.bf16.mxu0 0
    %965 = vmatpush1.bf16.msra.mxu0 0
    %966 = vmatprep.subr.bf16.mxu0 0
    %967 = vmatpush1.bf16.msra.mxu0 0
    %968 = vmatprep.subr.bf16.mxu0 0
    %969 = vmatpush1.bf16.msra.mxu0 0
    %970 = vmatprep.subr.bf16.mxu0 0
    %971 = vmatpush1.bf16.msra.mxu0 0
    %972 = vmatprep.subr.bf16.mxu0 0
    %973 = vmatpush1.bf16.msra.mxu0 0
    %974 = vmatprep.subr.bf16.mxu0 0
    %975 = vmatpush1.bf16.msra.mxu0 0
    %976 = vmatprep.subr.bf16.mxu0 0
    %977 = vmatpush1.bf16.msra.mxu0 0
    %978 = vmatprep.mubr.bf16.mxu0 0
    %979 = vmatmul.mubr.bf16.gmra.mrb[0].mxu0 %v855
    %v980 = vpop.f32.mrb[0].mxu0
    %v981 = vadd.f32 %v940, %v980
    %v982 = vpop.f32.mrb[0].mxu0
    %v983 = vadd.f32 %v942, %v982
    %v984 = vpop.f32.mrb[0].mxu0
    %v985 = vpop.f32.mrb[0].mxu0
    %986 = vdwg.mxu0
    %v987 = vmax.f32 %v981, 0.0
    %v988 = vmax.f32 %v983, 0.0
    %v989 = vpack.c.bf16 %v987, %v987
    %v990 = vpack.c.bf16 %v988, %v988
    %v991 = vld [vmem:[%s5] sm:$0xf]
    %v992 = vld [vmem:[%s5 + $0x4] sm:$0xf]
    %v993 = vld [vmem:[%s5 + $0x8] sm:$0xf]
    %v994 = vld [vmem:[%s5 + $0xc] sm:$0xf]
    %v995 = vld [vmem:[%s5 + $0x10] sm:$0xf]
    %v996 = vld [vmem:[%s5 + $0x14] sm:$0xf]
    %v997 = vld [vmem:[%s5 + $0x18] sm:$0xf]
    %v998 = vld [vmem:[%s5 + $0x1c] sm:$0xf]
    %v999 = vld [vmem:[%s5 + $0x20] sm:$0xf]
    %v1000 = vld [vmem:[%s5 + $0x24] sm:$0xf]
    %v1001 = vld [vmem:[%s5 + $0x28] sm:$0xf]
    %v1002 = vld [vmem:[%s5 + $0x2c] sm:$0xf]
    %v1003 = vld [vmem:[%s5 + $0x30] sm:$0xf]
    %v1004 = vld [vmem:[%s5 + $0x34] sm:$0xf]
    %v1005 = vld [vmem:[%s5 + $0x38] sm:$0xf]
    %v1006 = vld [vmem:[%s5 + $0x3c] sm:$0xf]
    %v1007 = vld [vmem:[%s5 + $0x40] sm:$0xf]
    %v1008 = vld [vmem:[%s5 + $0x44] sm:$0xf]
    %v1009 = vld [vmem:[%s5 + $0x48] sm:$0xf]
    %v1010 = vld [vmem:[%s5 + $0x4c] sm:$0xf]
    %v1011 = vld [vmem:[%s5 + $0x50] sm:$0xf]
    %v1012 = vld [vmem:[%s5 + $0x54] sm:$0xf]
    %v1013 = vld [vmem:[%s5 + $0x58] sm:$0xf]
    %v1014 = vld [vmem:[%s5 + $0x5c] sm:$0xf]
    %v1015 = vld [vmem:[%s5 + $0x60] sm:$0x3]
    %v1016 = vld [vmem:[%s6] sm:$0x1]
    %v1018 = vlaneseq
    %v1019 = vshrl.u32 %v1018, 7
    %v1020 = vsub.s32 0, %v1019
    %v1021 = vrot.slane %v1016, %v1020
    %v1048 = vunpack.c.l.b16 %v991
    %v1049 = vunpack.c.l.b16 %v992
    %v1050 = vunpack.c.l.b16 %v993
    %v1051 = vunpack.c.l.b16 %v994
    %v1052 = vunpack.c.l.b16 %v995
    %v1053 = vunpack.c.l.b16 %v996
    %v1054 = vunpack.c.l.b16 %v997
    %v1055 = vunpack.c.l.b16 %v998
    %v1056 = vunpack.c.l.b16 %v999
    %v1057 = vunpack.c.l.b16 %v1000
    %v1058 = vunpack.c.l.b16 %v1001
    %v1059 = vunpack.c.l.b16 %v1002
    %v1060 = vunpack.c.l.b16 %v1003
    %v1061 = vunpack.c.l.b16 %v1004
    %v1062 = vunpack.c.l.b16 %v1005
    %v1063 = vunpack.c.l.b16 %v1006
    %v1064 = vunpack.c.l.b16 %v1007
    %v1065 = vunpack.c.l.b16 %v1008
    %v1066 = vunpack.c.l.b16 %v1009
    %v1067 = vunpack.c.l.b16 %v1010
    %v1068 = vunpack.c.l.b16 %v1011
    %v1069 = vunpack.c.l.b16 %v1012
    %v1070 = vunpack.c.l.b16 %v1013
    %v1071 = vunpack.c.l.b16 %v1014
    %v1072 = vunpack.c.l.b16 %v1015
    %v1073 = vpack.c.b16 %v1049, %v1048
    %v1074 = vpack.c.b16 %v1051, %v1050
    %v1075 = vpack.c.b16 %v1053, %v1052
    %v1076 = vpack.c.b16 %v1055, %v1054
    %v1077 = vpack.c.b16 %v1057, %v1056
    %v1078 = vpack.c.b16 %v1059, %v1058
    %v1079 = vpack.c.b16 %v1061, %v1060
    %v1080 = vpack.c.b16 %v1063, %v1062
    %v1081 = vpack.c.b16 %v1065, %v1064
    %v1082 = vpack.c.b16 %v1067, %v1066
    %v1083 = vpack.c.b16 %v1069, %v1068
    %v1084 = vpack.c.b16 %v1071, %v1070
    %v1085 = vpack.c.b16 %v1072, %v1072
    %vm1098 = vcmask 556032
    %v1100 = vsel %vm1098, %v990, 0
    %v1103 = vsel %vm251, %v1085, 0
    %1105 = vmatprep.subr.bf16.mxu0 0
    %1106 = vmatpush1.bf16.msra.mxu0 %v1073
    %1107 = vmatprep.subr.bf16.mxu0 0
    %1108 = vmatpush1.bf16.msra.mxu0 %v1074
    %1109 = vmatprep.subr.bf16.mxu0 0
    %1110 = vmatpush1.bf16.msra.mxu0 %v1075
    %1111 = vmatprep.subr.bf16.mxu0 0
    %1112 = vmatpush1.bf16.msra.mxu0 %v1076
    %1113 = vmatprep.subr.bf16.mxu0 0
    %1114 = vmatpush1.bf16.msra.mxu0 %v1077
    %1115 = vmatprep.subr.bf16.mxu0 0
    %1116 = vmatpush1.bf16.msra.mxu0 %v1078
    %1117 = vmatprep.subr.bf16.mxu0 0
    %1118 = vmatpush1.bf16.msra.mxu0 %v1079
    %1119 = vmatprep.subr.bf16.mxu0 0
    %1120 = vmatpush1.bf16.msra.mxu0 %v1080
    %1121 = vmatprep.subr.bf16.mxu0 0
    %1122 = vmatpush1.bf16.msra.mxu0 %v1081
    %1123 = vmatprep.subr.bf16.mxu0 0
    %1124 = vmatpush1.bf16.msra.mxu0 %v1082
    %1125 = vmatprep.subr.bf16.mxu0 0
    %1126 = vmatpush1.bf16.msra.mxu0 %v1083
    %1127 = vmatprep.subr.bf16.mxu0 0
    %1128 = vmatpush1.bf16.msra.mxu0 %v1084
    %1129 = vmatprep.subr.bf16.mxu0 0
    %1130 = vmatpush1.bf16.msra.mxu0 %v1103
    %1131 = vmatprep.subr.bf16.mxu0 0
    %1132 = vmatpush1.bf16.msra.mxu0 0
    %1133 = vmatprep.subr.bf16.mxu0 0
    %1134 = vmatpush1.bf16.msra.mxu0 0
    %1135 = vmatprep.subr.bf16.mxu0 0
    %1136 = vmatpush1.bf16.msra.mxu0 0
    %1137 = vmatprep.mubr.bf16.mxu0 %v1100
    %1138 = vmatmul.mubr.bf16.gmra.mrb[0].mxu0 %v989
    %v1139 = vpop.f32.mrb[0].mxu0
    %v1140 = vadd.f32 %v1021, %v1139
    %v1141 = vpop.f32.mrb[0].mxu0
    %v1142 = vpop.f32.mrb[0].mxu0
    %v1143 = vpop.f32.mrb[0].mxu0
    %1144 = vdwg.mxu0
    %v1145 = vmax.f32 %v1140, 0.0
    %v1146 = vpack.c.bf16 %v1145, %v1145
    %v1147 = vld [vmem:[%s7] sm:$0xf]
    %v1148 = vld [vmem:[%s7 + $0x4] sm:$0xf]
    %v1149 = vld [vmem:[%s7 + $0x8] sm:$0xf]
    %v1150 = vld [vmem:[%s7 + $0xc] sm:$0xf]
    %v1151 = vld [vmem:[%s7 + $0x10] sm:$0xf]
    %v1152 = vld [vmem:[%s7 + $0x14] sm:$0xf]
    %v1153 = vld [vmem:[%s7 + $0x18] sm:$0x1]
    %v1154 = vld [vmem:[%s8] sm:$0x1]
    %v1156 = vlaneseq
    %v1157 = vshrl.u32 %v1156, 7
    %v1158 = vsub.s32 0, %v1157
    %v1159 = vrot.slane %v1154, %v1158
    %v1168 = vunpack.c.l.b16 %v1147
    %v1169 = vunpack.c.l.b16 %v1148
    %v1170 = vunpack.c.l.b16 %v1149
    %v1171 = vunpack.c.l.b16 %v1150
    %v1172 = vunpack.c.l.b16 %v1151
    %v1173 = vunpack.c.l.b16 %v1152
    %v1174 = vunpack.c.l.b16 %v1153
    %v1175 = vpack.c.b16 %v1169, %v1168
    %v1176 = vpack.c.b16 %v1171, %v1170
    %v1177 = vpack.c.b16 %v1173, %v1172
    %v1178 = vpack.c.b16 %v1174, %v1174
    %vm1182 = vcmask 400384
    %v1184 = vsel %vm1182, %v1146, 0
    %vm1186 = vcmask 1040384
    %v1187 = vsel 0, 4294967295, 65535
    %v1188 = vsel %vm1186, %v1187, 0
    %v1190 = vand.u32 %v1178, %v1188
    %1192 = vmatprep.subr.bf16.mxu0 0
    %1193 = vmatpush1.bf16.msra.mxu0 %v1175
    %1194 = vmatprep.subr.bf16.mxu0 0
    %1195 = vmatpush1.bf16.msra.mxu0 %v1176
    %1196 = vmatprep.subr.bf16.mxu0 0
    %1197 = vmatpush1.bf16.msra.mxu0 %v1177
    %1198 = vmatprep.subr.bf16.mxu0 0
    %1199 = vmatpush1.bf16.msra.mxu0 %v1190
    %1200 = vmatprep.subr.bf16.mxu0 0
    %1201 = vmatpush1.bf16.msra.mxu0 0
    %1202 = vmatprep.subr.bf16.mxu0 0
    %1203 = vmatpush1.bf16.msra.mxu0 0
    %1204 = vmatprep.subr.bf16.mxu0 0
    %1205 = vmatpush1.bf16.msra.mxu0 0
    %1206 = vmatprep.subr.bf16.mxu0 0
    %1207 = vmatpush1.bf16.msra.mxu0 0
    %1208 = vmatprep.subr.bf16.mxu0 0
    %1209 = vmatpush1.bf16.msra.mxu0 0
    %1210 = vmatprep.subr.bf16.mxu0 0
    %1211 = vmatpush1.bf16.msra.mxu0 0
    %1212 = vmatprep.subr.bf16.mxu0 0
    %1213 = vmatpush1.bf16.msra.mxu0 0
    %1214 = vmatprep.subr.bf16.mxu0 0
    %1215 = vmatpush1.bf16.msra.mxu0 0
    %1216 = vmatprep.subr.bf16.mxu0 0
    %1217 = vmatpush1.bf16.msra.mxu0 0
    %1218 = vmatprep.subr.bf16.mxu0 0
    %1219 = vmatpush1.bf16.msra.mxu0 0
    %1220 = vmatprep.subr.bf16.mxu0 0
    %1221 = vmatpush1.bf16.msra.mxu0 0
    %1222 = vmatprep.subr.bf16.mxu0 0
    %1223 = vmatpush1.bf16.msra.mxu0 0
    %1224 = vmatprep.mubr.bf16.mxu0 0
    %1225 = vmatmul.mubr.bf16.gmra.mrb[0].mxu0 %v1184
    %v1226 = vpop.f32.mrb[0].mxu0
    %v1227 = vadd.f32 %v1159, %v1226
    %v1228 = vpop.f32.mrb[0].mxu0
    %v1229 = vpop.f32.mrb[0].mxu0
    %v1230 = vpop.f32.mrb[0].mxu0
    %1231 = vdwg.mxu0
    %1232 = vst [vmem:[#allocation2] sm:$0xff] %v1227
    // Predicated region
    $region38: #{tpu_custom_call.1} parent=1 // pred_check
      _
    $region39: #{tpu_custom_call.1} parent=1 // pred_check_branch
      %1234 = sbr.rel (0) target = $region41
    $region40: #{tpu_custom_call.1} parent=1 // pred_region
      %s1236 = ssub.s32 128, 128
      %1237 = vsyncadd [#allocation3], %s1236
      %s1239 = sshll.u32 [#allocation2], 4
      %s1240 = int_to_ptr.vmem [resolvable:$true] %s1239
      %1242 = dma.vmem_to_hbm [thread:$0]  %s1240, 128, %s9, [#allocation3]
    $region41: #{tpu_custom_call.1} parent=1 // pred_fallthru
      _
    // Predicated region
    $region42: #{tpu_custom_call.1} parent=1 // pred_check
      _
    $region43: #{tpu_custom_call.1} parent=1 // pred_check_branch
      %1244 = sbr.rel (0) target = $region45
    $region44: #{tpu_custom_call.1} parent=1 // pred_region
      %1245 = dma.done [#allocation3], 128
    $region45: #{tpu_custom_call.1} parent=1 // pred_fallthru
      _
    %1246 = vsyncpa [#allocation3], 1

</llo_original>
